<compile_context>
chip_gen: v7x
topology: tpu7x:2x2x1
jax: 0.10.0
libtpu: 0.0.40
codegen_flags: <defaults>
</compile_context>

<pallas_src>
import functools
import math

import jax
import jax.numpy as jnp
from jax.experimental import pallas as pl
from jax.experimental.pallas import tpu as pltpu


def _round_up(x, m):
    return ((x + m - 1) // m) * m


def _gcnii_kernel(x_k_ref, x_i_ref, a_ref, w_ref, b_ref, o_ref, acc_ref, *,
                  alpha):
    """Grid = (row_tiles, k_tiles); axis 1 is the A @ X reduction axis."""
    k = pl.program_id(1)

    # Graph propagation PX = A @ X, accumulated in f32 VMEM scratch.
    prod = jnp.dot(a_ref[...], x_k_ref[...],
                   preferred_element_type=jnp.float32)

    @pl.when(k == 0)
    def _first_k():
        acc_ref[...] = prod            # write-on-first-k: no zero-init pass

    @pl.when(k > 0)
    def _accumulate():
        acc_ref[...] += prod

    @pl.when(k == pl.num_programs(1) - 1)
    def _epilogue():
        # Initial residual: first = (1 - alpha) * PX + alpha * X_0
        first = (1.0 - alpha) * acc_ref[...] \
            + alpha * x_i_ref[...].astype(jnp.float32)
        # Identity mapping (and the optional n_layer==1 projection) are folded
        # into a single pre-computed weight in the wrapper:
        #   W_fold = [Wproj @] (beta * W + (1 - beta) * I)
        out = jnp.dot(first.astype(w_ref.dtype), w_ref[...],
                      preferred_element_type=jnp.float32)
        out = out + b_ref[...].astype(jnp.float32)
        o_ref[...] = out.astype(o_ref.dtype)


@functools.partial(
    jax.jit,
    static_argnames=("n_layer", "alpha", "l_lambda", "tm", "tk",
                     "compute_dtype", "single_buffer_weights"))
def _gcnii_forward_impl(X, A, kernel, kernel_projection, bias, *,
                        n_layer, alpha, l_lambda, tm, tk,
                        compute_dtype, single_buffer_weights):
    N, F = X.shape
    C = kernel.shape[0]
    assert A.shape == (N, N)
    assert kernel.shape == (C, C)
    assert bias.shape == (N, C)

    project = (n_layer == 1)
    if project:
        assert kernel_projection.shape == (F, C)
    else:
        # Mirrors the reference module's contract: first @ kernel needs F == C.
        assert F == C

    beta = math.log(l_lambda / n_layer + 1.0)
    out_dtype = X.dtype

    # --- Fold the identity mapping (and projection) into one weight ---------
    #   out = first @ W_fold + bias
    w_eff = (beta * kernel.astype(jnp.float32)
             + (1.0 - beta) * jnp.eye(C, dtype=jnp.float32))
    if project:
        w_fold = kernel_projection.astype(jnp.float32) @ w_eff    # (F, C)
    else:
        w_fold = w_eff                                            # (C, C) == (F, C)

    # --- Streaming dtype of the big operands ---------------------------------
    stream_dtype = compute_dtype if compute_dtype is not None else X.dtype
    sub32 = jnp.dtype(stream_dtype).itemsize < 4
    row_mult = 16 if sub32 else 8

    # Lane-dense padding of the feature / channel axes.
    Fp = _round_up(F, 128)
    Cp = _round_up(C, 128)

    # Tile sizes (clamped for small graphs).  TK is the lane dim of the A
    # block: keep it a multiple of 128 for unmasked vector loads on the hot
    # adjacency stream.  TM stays a sublane multiple (16 for bf16 packing).
    TM = _round_up(min(tm, _round_up(N, row_mult)), row_mult)
    TK = _round_up(min(tk, _round_up(N, 128)), 128)
    Np_r = _round_up(N, TM)      # padded rows (A rows / output rows)
    Np_c = _round_up(N, TK)      # padded K extent (A cols / X rows)
    Np_x = max(Np_r, Np_c)       # X serves both roles (residual + K stream)

    # pad + astype fuse under this jit into (at most) one HBM pass per array;
    # they are no-ops when shapes already align and no cast is requested.
    Xp = jnp.pad(X.astype(stream_dtype), ((0, Np_x - N), (0, Fp - F)))
    Ap = jnp.pad(A.astype(stream_dtype), ((0, Np_r - N), (0, Np_c - N)))
    Wp = jnp.pad(w_fold.astype(stream_dtype), ((0, Fp - F), (0, Cp - C)))
    Bp = jnp.pad(bias.astype(jnp.float32), ((0, Np_r - N), (0, Cp - C)))

    # Grid-invariant / slowly-varying operands: single-buffer to save VMEM.
    if single_buffer_weights:
        w_spec = pl.BlockSpec((Fp, Cp), lambda i, k: (0, 0),
                              pipeline_mode=pl.Buffered(1))
        b_spec = pl.BlockSpec((TM, Cp), lambda i, k: (i, 0),
                              pipeline_mode=pl.Buffered(1))
    else:
        w_spec = pl.BlockSpec((Fp, Cp), lambda i, k: (0, 0))
        b_spec = pl.BlockSpec((TM, Cp), lambda i, k: (i, 0))

    in_specs = [
        pl.BlockSpec((TK, Fp), lambda i, k: (k, 0)),   # X streamed over K
        pl.BlockSpec((TM, Fp), lambda i, k: (i, 0)),   # X_0 residual row tile
        pl.BlockSpec((TM, TK), lambda i, k: (i, k)),   # A tile (hot stream)
        w_spec,                                        # folded weight W_fold
        b_spec,                                        # bias row tile
    ]

    # Explicit scoped-VMEM budget sized from the tile footprint.
    it_s = jnp.dtype(stream_dtype).itemsize
    it_o = jnp.dtype(out_dtype).itemsize
    nbuf_w = 1 if single_buffer_weights else 2
    est = (2 * TM * TK * it_s          # A (double-buffered)
           + 2 * TK * Fp * it_s        # X (K stream)
           + 2 * TM * Fp * it_s        # X_0 residual
           + nbuf_w * Fp * Cp * it_s   # W_fold
           + nbuf_w * TM * Cp * 4      # bias (f32)
           + 2 * TM * Cp * it_o        # output
           + TM * Fp * 4)              # f32 accumulator scratch
    vmem_limit = int(min(max(est * 3 // 2, 32 * 1024 * 1024),
                         100 * 1024 * 1024))

    grid = (Np_r // TM, Np_c // TK)
    kern = functools.partial(_gcnii_kernel, alpha=float(alpha))

    out_p = pl.pallas_call(
        kern,
        out_shape=jax.ShapeDtypeStruct((Np_r, Cp), out_dtype),
        grid=grid,
        in_specs=in_specs,
        out_specs=pl.BlockSpec((TM, Cp), lambda i, k: (i, 0)),
        scratch_shapes=[pltpu.VMEM((TM, Fp), jnp.float32)],
        compiler_params=pltpu.CompilerParams(
            dimension_semantics=("parallel", "arbitrary"),
            vmem_limit_bytes=vmem_limit),
    )(Xp, Xp, Ap, Wp, Bp)

    return out_p[:N, :C]


def gcnii_forward(X, A, kernel, kernel_projection, bias, *, n_layer,
                  alpha=0.2, l_lambda=0.8, tm=256, tk=512,
                  compute_dtype=jnp.bfloat16):
    """Pallas implementation of GCNII.forward((X, A)).

    A, X and the folded weight stream in `compute_dtype` (bf16 by default;
    pass compute_dtype=None to keep the input dtype) with f32 accumulation.
    On v6e (128 MiB VMEM) larger tiles (tk=1024-2048, tm=512) amortize
    per-step overhead; on v7x keep the default footprint and, for
    128 <= N <= 512, pass a smaller tm so both TensorCores get a row tile.
    """
    kwargs = dict(n_layer=n_layer, alpha=float(alpha),
                  l_lambda=float(l_lambda), tm=int(tm), tk=int(tk),
                  compute_dtype=compute_dtype)
    try:
        return _gcnii_forward_impl(X, A, kernel, kernel_projection, bias,
                                   single_buffer_weights=True, **kwargs)
    except Exception:
        # Compatibility fallback for Pallas versions without
        # BlockSpec(pipeline_mode=pl.Buffered(1)) support.
        return _gcnii_forward_impl(X, A, kernel, kernel_projection, bias,
                                   single_buffer_weights=False, **kwargs)


def _xavier_uniform(key, shape):
    fan_in, fan_out = shape[0], shape[1]
    bound = math.sqrt(6.0 / (fan_in + fan_out))
    return jax.random.uniform(key, shape, jnp.float32, -bound, bound)


def gcnii_reference(X, A, kernel, kernel_projection, bias, *,
                    n_layer, alpha=0.2, l_lambda=0.8):
    beta = math.log(l_lambda / n_layer + 1.0)
    PX = A @ X
    first = (1.0 - alpha) * PX + alpha * X
    if n_layer == 1:
        first = first @ kernel_projection
    out = beta * (first @ kernel) + (1.0 - beta) * first
    return out + bias


if __name__ == "__main__":
    # Small shapes consistent with the module: N nodes, F input features,
    # `channels` hidden size.  n_layer=1 exercises the projection path,
    # n_layer=2 the plain (F == channels) path.
    N, F, channels = 16, 8, 32
    alpha, l_lambda = 0.2, 0.8

    key = jax.random.PRNGKey(0)
    k_x, k_a, k_w, k_wp, k_x2 = jax.random.split(key, 5)

    # Row-normalized dense "adjacency"-like matrix.
    A_raw = jax.random.uniform(k_a, (N, N), jnp.float32)
    A = A_raw / jnp.sum(A_raw, axis=1, keepdims=True)

    kernel = _xavier_uniform(k_w, (channels, channels))
    kernel_projection = _xavier_uniform(k_wp, (F, channels))
    bias = jnp.ones((N, channels), jnp.float32)

    # --- n_layer = 1 (input projection path), default bf16 streaming ---
    X1 = jax.random.normal(k_x, (N, F), jnp.float32)
    out1 = jax.block_until_ready(
        gcnii_forward(X1, A, kernel, kernel_projection, bias,
                      n_layer=1, alpha=alpha, l_lambda=l_lambda))
    ref1 = gcnii_reference(X1, A, kernel, kernel_projection, bias,
                           n_layer=1, alpha=alpha, l_lambda=l_lambda)
    assert out1.shape == (N, channels)
    assert jnp.allclose(out1, ref1, atol=7e-2, rtol=7e-2), \
        float(jnp.max(jnp.abs(out1 - ref1)))

    # --- n_layer = 2 (no projection; F == channels), f32 streaming ---
    X2 = jax.random.normal(k_x2, (N, channels), jnp.float32)
    out2 = jax.block_until_ready(
        gcnii_forward(X2, A, kernel, kernel_projection, bias,
                      n_layer=2, alpha=alpha, l_lambda=l_lambda,
                      compute_dtype=None))
    ref2 = gcnii_reference(X2, A, kernel, kernel_projection, bias,
                           n_layer=2, alpha=alpha, l_lambda=l_lambda)
    assert out2.shape == (N, channels)
    assert jnp.allclose(out2, ref2, atol=3e-2, rtol=3e-2), \
        float(jnp.max(jnp.abs(out2 - ref2)))

    print("KERNEL_OK")
</pallas_src>

<mosaic_0001>
module attributes {stable_mosaic.version = 11 : i64} {
  func.func @_gcnii_kernel(%arg0: i32, %arg1: i32, %arg2: memref<128x128xbf16, #tpu.memory_space<vmem>>, %arg3: memref<16x128xbf16, #tpu.memory_space<vmem>>, %arg4: memref<16x128xbf16, #tpu.memory_space<vmem>>, %arg5: memref<128x128xbf16, #tpu.memory_space<vmem>>, %arg6: memref<16x128xf32, #tpu.memory_space<vmem>>, %arg7: memref<16x128xf32, #tpu.memory_space<vmem>>, %arg8: memref<16x128xf32, #tpu.memory_space<vmem>>) attributes {dimension_semantics = [#tpu.dimension_semantics<parallel>, #tpu.dimension_semantics<arbitrary>], iteration_bounds = array<i64: 1, 1>, scalar_prefetch = 0 : i64, scratch_operands = 1 : i64, tpu.core_type = #tpu.core_type<tc>, window_params = [{transform_indices = @transform_0, window_bounds = array<i64: 128, 128>}, {transform_indices = @transform_1, window_bounds = array<i64: 16, 128>}, {transform_indices = @transform_2, window_bounds = array<i64: 16, 128>}, {pipeline_mode = #tpu.pipeline_mode<synchronous>, transform_indices = @transform_3, window_bounds = array<i64: 128, 128>}, {pipeline_mode = #tpu.pipeline_mode<synchronous>, transform_indices = @transform_4, window_bounds = array<i64: 16, 128>}, {transform_indices = @transform_5, window_bounds = array<i64: 16, 128>}]} {
    %c0 = arith.constant 0 : index
    %c0_0 = arith.constant 0 : index
    %0 = vector.load %arg4[%c0, %c0_0] : memref<16x128xbf16, #tpu.memory_space<vmem>>, vector<16x128xbf16>
    %c0_1 = arith.constant 0 : index
    %c0_2 = arith.constant 0 : index
    %1 = vector.load %arg2[%c0_1, %c0_2] : memref<128x128xbf16, #tpu.memory_space<vmem>>, vector<128x128xbf16>
    %cst = arith.constant dense<0.000000e+00> : vector<16x128xf32>
    %2 = tpu.matmul %0, %1, %cst {dimension_numbers = #tpu.dot_dimension_numbers<[1], [0], [0], [1], [0, 0, 1, 1], [], []>} : vector<16x128xbf16>, vector<128x128xbf16>, vector<16x128xf32> -> vector<16x128xf32>
    %c0_i32 = arith.constant 0 : i32
    %3 = arith.cmpi eq, %arg1, %c0_i32 : i32
    %4 = arith.extui %3 : i1 to i32
    %c0_i32_3 = arith.constant 0 : i32
    %5 = arith.cmpi ne, %4, %c0_i32_3 : i32
    scf.if %5 {
      %c0_8 = arith.constant 0 : index
      %c0_9 = arith.constant 0 : index
      %12 = vector.load %arg8[%c0_8, %c0_9] : memref<16x128xf32, #tpu.memory_space<vmem>>, vector<16x128xf32>
      tpu.vector_store %arg8[%c0_8, %c0_9], %2 {strides = array<i32>} : memref<16x128xf32, #tpu.memory_space<vmem>>, vector<16x128xf32>,
    } else {
    }
    %c0_i32_4 = arith.constant 0 : i32
    %6 = arith.cmpi sgt, %arg1, %c0_i32_4 : i32
    %7 = arith.extui %6 : i1 to i32
    %c0_i32_5 = arith.constant 0 : i32
    %8 = arith.cmpi ne, %7, %c0_i32_5 : i32
    scf.if %8 {
      %c0_8 = arith.constant 0 : index
      %c0_9 = arith.constant 0 : index
      %12 = vector.load %arg8[%c0_8, %c0_9] : memref<16x128xf32, #tpu.memory_space<vmem>>, vector<16x128xf32>
      %13 = arith.addf %12, %2 : vector<16x128xf32>
      %c0_10 = arith.constant 0 : index
      %c0_11 = arith.constant 0 : index
      %14 = vector.load %arg8[%c0_10, %c0_11] : memref<16x128xf32, #tpu.memory_space<vmem>>, vector<16x128xf32>
      tpu.vector_store %arg8[%c0_10, %c0_11], %13 {strides = array<i32>} : memref<16x128xf32, #tpu.memory_space<vmem>>, vector<16x128xf32>,
    } else {
    }
    %c0_i32_6 = arith.constant 0 : i32
    %9 = arith.cmpi eq, %arg1, %c0_i32_6 : i32
    %10 = arith.extui %9 : i1 to i32
    %c0_i32_7 = arith.constant 0 : i32
    %11 = arith.cmpi ne, %10, %c0_i32_7 : i32
    scf.if %11 {
      %c0_8 = arith.constant 0 : index
      %c0_9 = arith.constant 0 : index
      %12 = vector.load %arg8[%c0_8, %c0_9] : memref<16x128xf32, #tpu.memory_space<vmem>>, vector<16x128xf32>
      %cst_10 = arith.constant 8.000000e-01 : f32
      %13 = vector.broadcast %cst_10 : f32 to vector<16x128xf32>
      %14 = arith.mulf %13, %12 : vector<16x128xf32>
      %c0_11 = arith.constant 0 : index
      %c0_12 = arith.constant 0 : index
      %15 = vector.load %arg3[%c0_11, %c0_12] : memref<16x128xbf16, #tpu.memory_space<vmem>>, vector<16x128xbf16>
      %16 = arith.extf %15 : vector<16x128xbf16> to vector<16x128xf32>
      %cst_13 = arith.constant 2.000000e-01 : f32
      %17 = vector.broadcast %cst_13 : f32 to vector<16x128xf32>
      %18 = arith.mulf %17, %16 : vector<16x128xf32>
      %19 = arith.addf %14, %18 : vector<16x128xf32>
      %20 = arith.truncf %19 : vector<16x128xf32> to vector<16x128xbf16>
      %c0_14 = arith.constant 0 : index
      %c0_15 = arith.constant 0 : index
      %21 = vector.load %arg5[%c0_14, %c0_15] : memref<128x128xbf16, #tpu.memory_space<vmem>>, vector<128x128xbf16>
      %cst_16 = arith.constant dense<0.000000e+00> : vector<16x128xf32>
      %22 = tpu.matmul %20, %21, %cst_16 {dimension_numbers = #tpu.dot_dimension_numbers<[1], [0], [0], [1], [0, 0, 1, 1], [], []>} : vector<16x128xbf16>, vector<128x128xbf16>, vector<16x128xf32> -> vector<16x128xf32>
      %c0_17 = arith.constant 0 : index
      %c0_18 = arith.constant 0 : index
      %23 = vector.load %arg6[%c0_17, %c0_18] : memref<16x128xf32, #tpu.memory_space<vmem>>, vector<16x128xf32>
      %24 = arith.addf %22, %23 : vector<16x128xf32>
      %c0_19 = arith.constant 0 : index
      %c0_20 = arith.constant 0 : index
      %25 = vector.load %arg7[%c0_19, %c0_20] : memref<16x128xf32, #tpu.memory_space<vmem>>, vector<16x128xf32>
      tpu.vector_store %arg7[%c0_19, %c0_20], %24 {strides = array<i32>} : memref<16x128xf32, #tpu.memory_space<vmem>>, vector<16x128xf32>,
    } else {
    }
    return
  }
  func.func @transform_0(%arg0: i32, %arg1: i32) -> (i32, i32) {
    %c0_i32 = arith.constant 0 : i32
    %c0_i32_0 = arith.constant 0 : i32
    return %arg1, %c0_i32 : i32, i32
  }
  func.func @transform_1(%arg0: i32, %arg1: i32) -> (i32, i32) {
    %c0_i32 = arith.constant 0 : i32
    %c0_i32_0 = arith.constant 0 : i32
    return %arg0, %c0_i32 : i32, i32
  }
  func.func @transform_2(%arg0: i32, %arg1: i32) -> (i32, i32) {
    %c0_i32 = arith.constant 0 : i32
    return %arg0, %arg1 : i32, i32
  }
  func.func @transform_3(%arg0: i32, %arg1: i32) -> (i32, i32) {
    %c0_i32 = arith.constant 0 : i32
    %c0_i32_0 = arith.constant 0 : i32
    %c0_i32_1 = arith.constant 0 : i32
    return %c0_i32, %c0_i32_0 : i32, i32
  }
  func.func @transform_4(%arg0: i32, %arg1: i32) -> (i32, i32) {
    %c0_i32 = arith.constant 0 : i32
    %c0_i32_0 = arith.constant 0 : i32
    return %arg0, %c0_i32 : i32, i32
  }
  func.func @transform_5(%arg0: i32, %arg1: i32) -> (i32, i32) {
    %c0_i32 = arith.constant 0 : i32
    %c0_i32_0 = arith.constant 0 : i32
    return %arg0, %c0_i32 : i32, i32
  }
}

module attributes {stable_mosaic.version = 11 : i64} {
  func.func @_gcnii_kernel(%arg0: i32, %arg1: i32, %arg2: memref<128x128xbf16, #tpu.memory_space<vmem>>, %arg3: memref<16x128xbf16, #tpu.memory_space<vmem>>, %arg4: memref<16x128xbf16, #tpu.memory_space<vmem>>, %arg5: memref<128x128xbf16, #tpu.memory_space<vmem>>, %arg6: memref<16x128xf32, #tpu.memory_space<vmem>>, %arg7: memref<16x128xf32, #tpu.memory_space<vmem>>, %arg8: memref<16x128xf32, #tpu.memory_space<vmem>>) attributes {dimension_semantics = [#tpu.dimension_semantics<parallel>, #tpu.dimension_semantics<arbitrary>], iteration_bounds = array<i64: 1, 1>, scalar_prefetch = 0 : i64, scratch_operands = 1 : i64, tpu.core_type = #tpu.core_type<tc>, window_params = [{transform_indices = @transform_0, window_bounds = array<i64: 128, 128>}, {transform_indices = @transform_1, window_bounds = array<i64: 16, 128>}, {transform_indices = @transform_2, window_bounds = array<i64: 16, 128>}, {pipeline_mode = #tpu.pipeline_mode<synchronous>, transform_indices = @transform_3, window_bounds = array<i64: 128, 128>}, {transform_indices = @transform_4, window_bounds = array<i64: 16, 128>}, {transform_indices = @transform_5, window_bounds = array<i64: 16, 128>}]} {
    %c0 = arith.constant 0 : index
    %c0_0 = arith.constant 0 : index
    %0 = vector.load %arg4[%c0, %c0_0] : memref<16x128xbf16, #tpu.memory_space<vmem>>, vector<16x128xbf16>
    %c0_1 = arith.constant 0 : index
    %c0_2 = arith.constant 0 : index
    %1 = vector.load %arg2[%c0_1, %c0_2] : memref<128x128xbf16, #tpu.memory_space<vmem>>, vector<128x128xbf16>
    %cst = arith.constant dense<0.000000e+00> : vector<16x128xf32>
    %2 = tpu.matmul %0, %1, %cst {dimension_numbers = #tpu.dot_dimension_numbers<[1], [0], [0], [1], [0, 0, 1, 1], [], []>} : vector<16x128xbf16>, vector<128x128xbf16>, vector<16x128xf32> -> vector<16x128xf32>
    %c0_i32 = arith.constant 0 : i32
    %3 = arith.cmpi eq, %arg1, %c0_i32 : i32
    %4 = arith.extui %3 : i1 to i32
    %c0_i32_3 = arith.constant 0 : i32
    %5 = arith.cmpi ne, %4, %c0_i32_3 : i32
    scf.if %5 {
      %c0_8 = arith.constant 0 : index
      %c0_9 = arith.constant 0 : index
      %12 = vector.load %arg8[%c0_8, %c0_9] : memref<16x128xf32, #tpu.memory_space<vmem>>, vector<16x128xf32>
      tpu.vector_store %arg8[%c0_8, %c0_9], %2 {strides = array<i32>} : memref<16x128xf32, #tpu.memory_space<vmem>>, vector<16x128xf32>,
    } else {
    }
    %c0_i32_4 = arith.constant 0 : i32
    %6 = arith.cmpi sgt, %arg1, %c0_i32_4 : i32
    %7 = arith.extui %6 : i1 to i32
    %c0_i32_5 = arith.constant 0 : i32
    %8 = arith.cmpi ne, %7, %c0_i32_5 : i32
    scf.if %8 {
      %c0_8 = arith.constant 0 : index
      %c0_9 = arith.constant 0 : index
      %12 = vector.load %arg8[%c0_8, %c0_9] : memref<16x128xf32, #tpu.memory_space<vmem>>, vector<16x128xf32>
      %13 = arith.addf %12, %2 : vector<16x128xf32>
      %c0_10 = arith.constant 0 : index
      %c0_11 = arith.constant 0 : index
      %14 = vector.load %arg8[%c0_10, %c0_11] : memref<16x128xf32, #tpu.memory_space<vmem>>, vector<16x128xf32>
      tpu.vector_store %arg8[%c0_10, %c0_11], %13 {strides = array<i32>} : memref<16x128xf32, #tpu.memory_space<vmem>>, vector<16x128xf32>,
    } else {
    }
    %c0_i32_6 = arith.constant 0 : i32
    %9 = arith.cmpi eq, %arg1, %c0_i32_6 : i32
    %10 = arith.extui %9 : i1 to i32
    %c0_i32_7 = arith.constant 0 : i32
    %11 = arith.cmpi ne, %10, %c0_i32_7 : i32
    scf.if %11 {
      %c0_8 = arith.constant 0 : index
      %c0_9 = arith.constant 0 : index
      %12 = vector.load %arg8[%c0_8, %c0_9] : memref<16x128xf32, #tpu.memory_space<vmem>>, vector<16x128xf32>
      %cst_10 = arith.constant 8.000000e-01 : f32
      %13 = vector.broadcast %cst_10 : f32 to vector<16x128xf32>
      %14 = arith.mulf %13, %12 : vector<16x128xf32>
      %c0_11 = arith.constant 0 : index
      %c0_12 = arith.constant 0 : index
      %15 = vector.load %arg3[%c0_11, %c0_12] : memref<16x128xbf16, #tpu.memory_space<vmem>>, vector<16x128xbf16>
      %16 = arith.extf %15 : vector<16x128xbf16> to vector<16x128xf32>
      %cst_13 = arith.constant 2.000000e-01 : f32
      %17 = vector.broadcast %cst_13 : f32 to vector<16x128xf32>
      %18 = arith.mulf %17, %16 : vector<16x128xf32>
      %19 = arith.addf %14, %18 : vector<16x128xf32>
      %20 = arith.truncf %19 : vector<16x128xf32> to vector<16x128xbf16>
      %c0_14 = arith.constant 0 : index
      %c0_15 = arith.constant 0 : index
      %21 = vector.load %arg5[%c0_14, %c0_15] : memref<128x128xbf16, #tpu.memory_space<vmem>>, vector<128x128xbf16>
      %cst_16 = arith.constant dense<0.000000e+00> : vector<16x128xf32>
      %22 = tpu.matmul %20, %21, %cst_16 {dimension_numbers = #tpu.dot_dimension_numbers<[1], [0], [0], [1], [0, 0, 1, 1], [], []>} : vector<16x128xbf16>, vector<128x128xbf16>, vector<16x128xf32> -> vector<16x128xf32>
      %c0_17 = arith.constant 0 : index
      %c0_18 = arith.constant 0 : index
      %23 = vector.load %arg6[%c0_17, %c0_18] : memref<16x128xf32, #tpu.memory_space<vmem>>, vector<16x128xf32>
      %24 = arith.addf %22, %23 : vector<16x128xf32>
      %c0_19 = arith.constant 0 : index
      %c0_20 = arith.constant 0 : index
      %25 = vector.load %arg7[%c0_19, %c0_20] : memref<16x128xf32, #tpu.memory_space<vmem>>, vector<16x128xf32>
      tpu.vector_store %arg7[%c0_19, %c0_20], %24 {strides = array<i32>} : memref<16x128xf32, #tpu.memory_space<vmem>>, vector<16x128xf32>,
    } else {
    }
    return
  }
  func.func @transform_0(%arg0: i32, %arg1: i32) -> (i32, i32) {
    %c0_i32 = arith.constant 0 : i32
    %c0_i32_0 = arith.constant 0 : i32
    return %arg1, %c0_i32 : i32, i32
  }
  func.func @transform_1(%arg0: i32, %arg1: i32) -> (i32, i32) {
    %c0_i32 = arith.constant 0 : i32
    %c0_i32_0 = arith.constant 0 : i32
    return %arg0, %c0_i32 : i32, i32
  }
  func.func @transform_2(%arg0: i32, %arg1: i32) -> (i32, i32) {
    %c0_i32 = arith.constant 0 : i32
    return %arg0, %arg1 : i32, i32
  }
  func.func @transform_3(%arg0: i32, %arg1: i32) -> (i32, i32) {
    %c0_i32 = arith.constant 0 : i32
    %c0_i32_0 = arith.constant 0 : i32
    %c0_i32_1 = arith.constant 0 : i32
    return %c0_i32, %c0_i32_0 : i32, i32
  }
  func.func @transform_4(%arg0: i32, %arg1: i32) -> (i32, i32) {
    %c0_i32 = arith.constant 0 : i32
    %c0_i32_0 = arith.constant 0 : i32
    return %arg0, %c0_i32 : i32, i32
  }
  func.func @transform_5(%arg0: i32, %arg1: i32) -> (i32, i32) {
    %c0_i32 = arith.constant 0 : i32
    %c0_i32_0 = arith.constant 0 : i32
    return %arg0, %c0_i32 : i32, i32
  }
}

</mosaic_0001>

<llo_original>
// kernel: _gcnii_forward_impl.1
$region0: #{_gcnii_forward_impl.1}
  #allocation0 [shape = 'u32[]', space=smem, size = 0x4, offset = 0x4, fixed_abs, tag = 'smem constant byte address 0x4 - core index']
  #allocation1 [shape = 'u32[144,128]{1,0:T(1,128)}', space=vmem, size = 0x12000, scoped, tag = 'internal scratch']
  #allocation2 [shape = 'f32[16,128]{1,0:T(8,128)}', space=vmem, size = 0x2000, scoped, tag = 'scratch operand']
  %s0 = inlined_call_operand.vmem [shape: bf16[128,128], index: 0, kind: input, shape index: {}, may-alias: {0,1}]
  %s1 = inlined_call_operand.vmem [shape: bf16[128,128], index: 1, kind: input, shape index: {}, may-alias: {0,1}]
  %s2 = inlined_call_operand.vmem [shape: bf16[16,128], index: 2, kind: input, shape index: {}]
  %s3 = inlined_call_operand.vmem [shape: bf16[128,128], index: 3, kind: input, shape index: {}]
  %s4 = inlined_call_operand.vmem [shape: f32[16,128], index: 4, kind: input, shape index: {}]
  %s5 = inlined_call_operand.hbm [shape: f32[16,128], index: 5, kind: output, shape index: {}]
  %s6 = sld [smem:[#allocation0]]
  $region42: #{_gcnii_forward_impl.1} parent=0
    _
  %s8 = ssub.s32 1, %s6
  %s9 = scalar_select 0, %s8, %s6
  $region1: #{_gcnii_forward_impl.1} parent=0
    #allocation3 [shape = 'u8[8192]{0}', space=vmem, size = 0x2000, scoped, tag = 'output window, operand 0, single buffered']
    #allocation4 [shape = 's32[1]{0}', space=sflag, size = 0x4, scoped, tag = 'scoped memory for _gcnii_forward_impl.1']
    %10 = vsyncpa [#allocation4], 0
    // Predicated region
    $region2: #{_gcnii_forward_impl.1} parent=1 // pred_check
      _
    $region3: #{_gcnii_forward_impl.1} parent=1 // pred_check_branch
      %12 = sbr.rel (0) target = $region5
    $region4: #{_gcnii_forward_impl.1} parent=1 // pred_region
      _
    $region5: #{_gcnii_forward_impl.1} parent=1 // pred_fallthru
      _
    // Predicated region
    $region6: #{_gcnii_forward_impl.1} parent=1 // pred_check
      _
    $region7: #{_gcnii_forward_impl.1} parent=1 // pred_check_branch
      %14 = sbr.rel (0) target = $region9
    $region8: #{_gcnii_forward_impl.1} parent=1 // pred_region
      _
    $region9: #{_gcnii_forward_impl.1} parent=1 // pred_fallthru
      _
    // Predicated region
    $region10: #{_gcnii_forward_impl.1} parent=1 // pred_check
      _
    $region11: #{_gcnii_forward_impl.1} parent=1 // pred_check_branch
      %16 = sbr.rel (0) target = $region13
    $region12: #{_gcnii_forward_impl.1} parent=1 // pred_region
      _
    $region13: #{_gcnii_forward_impl.1} parent=1 // pred_fallthru
      _
    // Predicated region
    $region14: #{_gcnii_forward_impl.1} parent=1 // pred_check
      _
    $region15: #{_gcnii_forward_impl.1} parent=1 // pred_check_branch
      %18 = sbr.rel (0) target = $region17
    $region16: #{_gcnii_forward_impl.1} parent=1 // pred_region
      _
    $region17: #{_gcnii_forward_impl.1} parent=1 // pred_fallthru
      _
    // Predicated region
    $region18: #{_gcnii_forward_impl.1} parent=1 // pred_check
      _
    $region19: #{_gcnii_forward_impl.1} parent=1 // pred_check_branch
      %20 = sbr.rel (0) target = $region21
    $region20: #{_gcnii_forward_impl.1} parent=1 // pred_region
      _
    $region21: #{_gcnii_forward_impl.1} parent=1 // pred_fallthru
      _
    %v22 = vld [vmem:[%s2] sm:$0xf]
    %v23 = vld [vmem:[%s2 + $0x4] sm:$0xf]
    %v24 = vld [vmem:[%s0] sm:$0xf]
    %v25 = vld [vmem:[%s0 + $0x4] sm:$0xf]
    %v26 = vld [vmem:[%s0 + $0x8] sm:$0xf]
    %v27 = vld [vmem:[%s0 + $0xc] sm:$0xf]
    %v28 = vld [vmem:[%s0 + $0x10] sm:$0xf]
    %v29 = vld [vmem:[%s0 + $0x14] sm:$0xf]
    %v30 = vld [vmem:[%s0 + $0x18] sm:$0xf]
    %v31 = vld [vmem:[%s0 + $0x1c] sm:$0xf]
    %v32 = vld [vmem:[%s0 + $0x20] sm:$0xf]
    %v33 = vld [vmem:[%s0 + $0x24] sm:$0xf]
    %v34 = vld [vmem:[%s0 + $0x28] sm:$0xf]
    %v35 = vld [vmem:[%s0 + $0x2c] sm:$0xf]
    %v36 = vld [vmem:[%s0 + $0x30] sm:$0xf]
    %v37 = vld [vmem:[%s0 + $0x34] sm:$0xf]
    %v38 = vld [vmem:[%s0 + $0x38] sm:$0xf]
    %v39 = vld [vmem:[%s0 + $0x3c] sm:$0xf]
    %v42 = vunpack.c.l.b16 %v22
    %v43 = vunpack.c.l.b16 %v23
    %v44 = vpack.c.b16 %v43, %v42
    %v62 = vunpack.c.l.b16 %v24
    %v63 = vunpack.c.l.b16 %v25
    %v64 = vunpack.c.l.b16 %v26
    %v65 = vunpack.c.l.b16 %v27
    %v66 = vunpack.c.l.b16 %v28
    %v67 = vunpack.c.l.b16 %v29
    %v68 = vunpack.c.l.b16 %v30
    %v69 = vunpack.c.l.b16 %v31
    %v70 = vunpack.c.l.b16 %v32
    %v71 = vunpack.c.l.b16 %v33
    %v72 = vunpack.c.l.b16 %v34
    %v73 = vunpack.c.l.b16 %v35
    %v74 = vunpack.c.l.b16 %v36
    %v75 = vunpack.c.l.b16 %v37
    %v76 = vunpack.c.l.b16 %v38
    %v77 = vunpack.c.l.b16 %v39
    %v78 = vpack.c.b16 %v63, %v62
    %v79 = vpack.c.b16 %v65, %v64
    %v80 = vpack.c.b16 %v67, %v66
    %v81 = vpack.c.b16 %v69, %v68
    %v82 = vpack.c.b16 %v71, %v70
    %v83 = vpack.c.b16 %v73, %v72
    %v84 = vpack.c.b16 %v75, %v74
    %v85 = vpack.c.b16 %v77, %v76
    %94 = vmatprep.subr.bf16.mxu0 0
    %95 = vmatpush1.bf16.msra.mxu0 %v78
    %96 = vmatprep.subr.bf16.mxu0 0
    %97 = vmatpush1.bf16.msra.mxu0 %v79
    %98 = vmatprep.subr.bf16.mxu0 0
    %99 = vmatpush1.bf16.msra.mxu0 %v80
    %100 = vmatprep.subr.bf16.mxu0 0
    %101 = vmatpush1.bf16.msra.mxu0 %v81
    %102 = vmatprep.subr.bf16.mxu0 0
    %103 = vmatpush1.bf16.msra.mxu0 %v82
    %104 = vmatprep.subr.bf16.mxu0 0
    %105 = vmatpush1.bf16.msra.mxu0 %v83
    %106 = vmatprep.subr.bf16.mxu0 0
    %107 = vmatpush1.bf16.msra.mxu0 %v84
    %108 = vmatprep.subr.bf16.mxu0 0
    %109 = vmatpush1.bf16.msra.mxu0 %v85
    %110 = vmatprep.subr.bf16.mxu0 0
    %111 = vmatpush1.bf16.msra.mxu0 0
    %112 = vmatprep.subr.bf16.mxu0 0
    %113 = vmatpush1.bf16.msra.mxu0 0
    %114 = vmatprep.subr.bf16.mxu0 0
    %115 = vmatpush1.bf16.msra.mxu0 0
    %116 = vmatprep.subr.bf16.mxu0 0
    %117 = vmatpush1.bf16.msra.mxu0 0
    %118 = vmatprep.subr.bf16.mxu0 0
    %119 = vmatpush1.bf16.msra.mxu0 0
    %120 = vmatprep.subr.bf16.mxu0 0
    %121 = vmatpush1.bf16.msra.mxu0 0
    %122 = vmatprep.subr.bf16.mxu0 0
    %123 = vmatpush1.bf16.msra.mxu0 0
    %124 = vmatprep.subr.bf16.mxu0 0
    %125 = vmatpush1.bf16.msra.mxu0 0
    %126 = vmatprep.mubr.bf16.mxu0 0
    %127 = vmatmul.mubr.bf16.gmra.mrb[0].mxu0 %v44
    %v128 = vpop.f32.mrb[0].mxu0
    %v129 = vadd.f32 0.0, %v128
    %v130 = vpop.f32.mrb[0].mxu0
    %v131 = vpop.f32.mrb[0].mxu0
    %v132 = vadd.f32 0.0, %v131
    %v133 = vpop.f32.mrb[0].mxu0
    %134 = vdwg.mxu0
    %p135 = scmp.eq.s32.totalorder 0, 0
    // Predicated region
    $region22: #{_gcnii_forward_impl.1} parent=1 // pred_check
      %p136 = pneg %p135
    $region23: #{_gcnii_forward_impl.1} parent=1 // pred_check_branch
      %138 = sbr.rel (%p136) target = $region25
    $region24: #{_gcnii_forward_impl.1} parent=1 // pred_region
      %139 = vst [vmem:[#allocation2] sm:$0xff] %v129
      %140 = vst [vmem:[#allocation2 + $0x8] sm:$0xff] %v132
    $region25: #{_gcnii_forward_impl.1} parent=1 // pred_fallthru
      _
    %p141 = scmp.gt.s32.totalorder 0, 0
    // Predicated region
    $region26: #{_gcnii_forward_impl.1} parent=1 // pred_check
      %p142 = pneg %p141
    $region27: #{_gcnii_forward_impl.1} parent=1 // pred_check_branch
      %144 = sbr.rel (%p142) target = $region29
    $region28: #{_gcnii_forward_impl.1} parent=1 // pred_region
      %v145 = vld [vmem:[#allocation2] sm:$0xff]
      %v146 = vld [vmem:[#allocation2 + $0x8] sm:$0xff]
      %v147 = vadd.f32 %v145, %v129
      %v148 = vadd.f32 %v146, %v132
      %149 = vst [vmem:[#allocation2] sm:$0xff] %v147
      %150 = vst [vmem:[#allocation2 + $0x8] sm:$0xff] %v148
    $region29: #{_gcnii_forward_impl.1} parent=1 // pred_fallthru
      _
    // Predicated region
    $region30: #{_gcnii_forward_impl.1} parent=1 // pred_check
      %p151 = pneg %p135
    $region31: #{_gcnii_forward_impl.1} parent=1 // pred_check_branch
      %153 = sbr.rel (%p151) target = $region33
    $region32: #{_gcnii_forward_impl.1} parent=1 // pred_region
      %v154 = vld [vmem:[#allocation2] sm:$0xff]
      %v155 = vld [vmem:[#allocation2 + $0x8] sm:$0xff]
      %v156 = vmul.f32 %v154, 0.8
      %v157 = vmul.f32 %v155, 0.8
      %v158 = vld [vmem:[%s1] sm:$0xf]
      %v159 = vld [vmem:[%s1 + $0x4] sm:$0xf]
      %v160 = vunpack.c.l.bf16 %v158
      %v161 = vunpack.c.l.bf16 %v159
      %v162 = vmul.f32 %v160, 0.2
      %v163 = vmul.f32 %v161, 0.2
      %v164 = vadd.f32 %v156, %v162
      %v165 = vadd.f32 %v157, %v163
      %v166 = vpack.c.bf16 %v165, %v164
      %v167 = vld [vmem:[%s3] sm:$0xf]
      %v168 = vld [vmem:[%s3 + $0x4] sm:$0xf]
      %v169 = vld [vmem:[%s3 + $0x8] sm:$0xf]
      %v170 = vld [vmem:[%s3 + $0xc] sm:$0xf]
      %v171 = vld [vmem:[%s3 + $0x10] sm:$0xf]
      %v172 = vld [vmem:[%s3 + $0x14] sm:$0xf]
      %v173 = vld [vmem:[%s3 + $0x18] sm:$0xf]
      %v174 = vld [vmem:[%s3 + $0x1c] sm:$0xf]
      %v175 = vld [vmem:[%s3 + $0x20] sm:$0xf]
      %v176 = vld [vmem:[%s3 + $0x24] sm:$0xf]
      %v177 = vld [vmem:[%s3 + $0x28] sm:$0xf]
      %v178 = vld [vmem:[%s3 + $0x2c] sm:$0xf]
      %v179 = vld [vmem:[%s3 + $0x30] sm:$0xf]
      %v180 = vld [vmem:[%s3 + $0x34] sm:$0xf]
      %v181 = vld [vmem:[%s3 + $0x38] sm:$0xf]
      %v182 = vld [vmem:[%s3 + $0x3c] sm:$0xf]
      %v183 = vld [vmem:[%s4] sm:$0xff]
      %v184 = vld [vmem:[%s4 + $0x8] sm:$0xff]
      %v201 = vunpack.c.l.b16 %v167
      %v202 = vunpack.c.l.b16 %v168
      %v203 = vunpack.c.l.b16 %v169
      %v204 = vunpack.c.l.b16 %v170
      %v205 = vunpack.c.l.b16 %v171
      %v206 = vunpack.c.l.b16 %v172
      %v207 = vunpack.c.l.b16 %v173
      %v208 = vunpack.c.l.b16 %v174
      %v209 = vunpack.c.l.b16 %v175
      %v210 = vunpack.c.l.b16 %v176
      %v211 = vunpack.c.l.b16 %v177
      %v212 = vunpack.c.l.b16 %v178
      %v213 = vunpack.c.l.b16 %v179
      %v214 = vunpack.c.l.b16 %v180
      %v215 = vunpack.c.l.b16 %v181
      %v216 = vunpack.c.l.b16 %v182
      %v217 = vpack.c.b16 %v202, %v201
      %v218 = vpack.c.b16 %v204, %v203
      %v219 = vpack.c.b16 %v206, %v205
      %v220 = vpack.c.b16 %v208, %v207
      %v221 = vpack.c.b16 %v210, %v209
      %v222 = vpack.c.b16 %v212, %v211
      %v223 = vpack.c.b16 %v214, %v213
      %v224 = vpack.c.b16 %v216, %v215
      %233 = vmatprep.subr.bf16.mxu0 0
      %234 = vmatpush1.bf16.msra.mxu0 %v217
      %235 = vmatprep.subr.bf16.mxu0 0
      %236 = vmatpush1.bf16.msra.mxu0 %v218
      %237 = vmatprep.subr.bf16.mxu0 0
      %238 = vmatpush1.bf16.msra.mxu0 %v219
      %239 = vmatprep.subr.bf16.mxu0 0
      %240 = vmatpush1.bf16.msra.mxu0 %v220
      %241 = vmatprep.subr.bf16.mxu0 0
      %242 = vmatpush1.bf16.msra.mxu0 %v221
      %243 = vmatprep.subr.bf16.mxu0 0
      %244 = vmatpush1.bf16.msra.mxu0 %v222
      %245 = vmatprep.subr.bf16.mxu0 0
      %246 = vmatpush1.bf16.msra.mxu0 %v223
      %247 = vmatprep.subr.bf16.mxu0 0
      %248 = vmatpush1.bf16.msra.mxu0 %v224
      %249 = vmatprep.subr.bf16.mxu0 0
      %250 = vmatpush1.bf16.msra.mxu0 0
      %251 = vmatprep.subr.bf16.mxu0 0
      %252 = vmatpush1.bf16.msra.mxu0 0
      %253 = vmatprep.subr.bf16.mxu0 0
      %254 = vmatpush1.bf16.msra.mxu0 0
      %255 = vmatprep.subr.bf16.mxu0 0
      %256 = vmatpush1.bf16.msra.mxu0 0
      %257 = vmatprep.subr.bf16.mxu0 0
      %258 = vmatpush1.bf16.msra.mxu0 0
      %259 = vmatprep.subr.bf16.mxu0 0
      %260 = vmatpush1.bf16.msra.mxu0 0
      %261 = vmatprep.subr.bf16.mxu0 0
      %262 = vmatpush1.bf16.msra.mxu0 0
      %263 = vmatprep.subr.bf16.mxu0 0
      %264 = vmatpush1.bf16.msra.mxu0 0
      %265 = vmatprep.mubr.bf16.mxu0 0
      %266 = vmatmul.mubr.bf16.gmra.mrb[0].mxu0 %v166
      %v267 = vpop.f32.mrb[0].mxu0
      %v268 = vadd.f32 %v183, %v267
      %v269 = vpop.f32.mrb[0].mxu0
      %v270 = vpop.f32.mrb[0].mxu0
      %v271 = vadd.f32 %v184, %v270
      %v272 = vpop.f32.mrb[0].mxu0
      %273 = vdwg.mxu0
      %274 = vst [vmem:[#allocation3] sm:$0xff] %v268
      %275 = vst [vmem:[#allocation3 + $0x8] sm:$0xff] %v271
    $region33: #{_gcnii_forward_impl.1} parent=1 // pred_fallthru
      _
    // Predicated region
    $region34: #{_gcnii_forward_impl.1} parent=1 // pred_check
      _
    $region35: #{_gcnii_forward_impl.1} parent=1 // pred_check_branch
      %277 = sbr.rel (0) target = $region37
    $region36: #{_gcnii_forward_impl.1} parent=1 // pred_region
      %s279 = ssub.s32 256, 256
      %280 = vsyncadd [#allocation4], %s279
      %s281 = sshll.u32 [#allocation3], 4
      %s282 = int_to_ptr.vmem [resolvable:$true] %s281
      %287 = dma.vmem_to_hbm [thread:$0]  %s282, 256, %s5, [#allocation4], 128, 128, 8
    $region37: #{_gcnii_forward_impl.1} parent=1 // pred_fallthru
      _
    // Predicated region
    $region38: #{_gcnii_forward_impl.1} parent=1 // pred_check
      _
    $region39: #{_gcnii_forward_impl.1} parent=1 // pred_check_branch
      %289 = sbr.rel (0) target = $region41
    $region40: #{_gcnii_forward_impl.1} parent=1 // pred_region
      %290 = dma.done [#allocation4], 256
    $region41: #{_gcnii_forward_impl.1} parent=1 // pred_fallthru
      _
    %291 = vsyncpa [#allocation4], 1

// kernel: _gcnii_forward_impl.1
$region0: #{_gcnii_forward_impl.1}
  #allocation0 [shape = 'u32[]', space=smem, size = 0x4, offset = 0x4, fixed_abs, tag = 'smem constant byte address 0x4 - core index']
  #allocation1 [shape = 'u32[144,128]{1,0:T(1,128)}', space=vmem, size = 0x12000, scoped, tag = 'internal scratch']
  #allocation2 [shape = 'f32[16,128]{1,0:T(8,128)}', space=vmem, size = 0x2000, scoped, tag = 'scratch operand']
  %s0 = inlined_call_operand.vmem [shape: bf16[128,128], index: 0, kind: input, shape index: {}, may-alias: {0,1}]
  %s1 = inlined_call_operand.vmem [shape: bf16[128,128], index: 1, kind: input, shape index: {}, may-alias: {0,1}]
  %s2 = inlined_call_operand.vmem [shape: bf16[16,128], index: 2, kind: input, shape index: {}]
  %s3 = inlined_call_operand.vmem [shape: bf16[128,128], index: 3, kind: input, shape index: {}]
  %s4 = inlined_call_operand.vmem [shape: f32[16,128], index: 4, kind: input, shape index: {}]
  %s5 = inlined_call_operand.hbm [shape: f32[16,128], index: 5, kind: output, shape index: {}]
  %s6 = sld [smem:[#allocation0]]
  $region42: #{_gcnii_forward_impl.1} parent=0
    _
  %s8 = ssub.s32 1, %s6
  %s9 = scalar_select 0, %s8, %s6
  $region1: #{_gcnii_forward_impl.1} parent=0
    #allocation3 [shape = 'u8[8192]{0}', space=vmem, size = 0x2000, scoped, tag = 'output window, operand 0, single buffered']
    #allocation4 [shape = 's32[1]{0}', space=sflag, size = 0x4, scoped, tag = 'scoped memory for _gcnii_forward_impl.1']
    %10 = vsyncpa [#allocation4], 0
    // Predicated region
    $region2: #{_gcnii_forward_impl.1} parent=1 // pred_check
      _
    $region3: #{_gcnii_forward_impl.1} parent=1 // pred_check_branch
      %12 = sbr.rel (0) target = $region5
    $region4: #{_gcnii_forward_impl.1} parent=1 // pred_region
      _
    $region5: #{_gcnii_forward_impl.1} parent=1 // pred_fallthru
      _
    // Predicated region
    $region6: #{_gcnii_forward_impl.1} parent=1 // pred_check
      _
    $region7: #{_gcnii_forward_impl.1} parent=1 // pred_check_branch
      %14 = sbr.rel (0) target = $region9
    $region8: #{_gcnii_forward_impl.1} parent=1 // pred_region
      _
    $region9: #{_gcnii_forward_impl.1} parent=1 // pred_fallthru
      _
    // Predicated region
    $region10: #{_gcnii_forward_impl.1} parent=1 // pred_check
      _
    $region11: #{_gcnii_forward_impl.1} parent=1 // pred_check_branch
      %16 = sbr.rel (0) target = $region13
    $region12: #{_gcnii_forward_impl.1} parent=1 // pred_region
      _
    $region13: #{_gcnii_forward_impl.1} parent=1 // pred_fallthru
      _
    // Predicated region
    $region14: #{_gcnii_forward_impl.1} parent=1 // pred_check
      _
    $region15: #{_gcnii_forward_impl.1} parent=1 // pred_check_branch
      %18 = sbr.rel (0) target = $region17
    $region16: #{_gcnii_forward_impl.1} parent=1 // pred_region
      _
    $region17: #{_gcnii_forward_impl.1} parent=1 // pred_fallthru
      _
    // Predicated region
    $region18: #{_gcnii_forward_impl.1} parent=1 // pred_check
      _
    $region19: #{_gcnii_forward_impl.1} parent=1 // pred_check_branch
      %20 = sbr.rel (0) target = $region21
    $region20: #{_gcnii_forward_impl.1} parent=1 // pred_region
      _
    $region21: #{_gcnii_forward_impl.1} parent=1 // pred_fallthru
      _
    %v22 = vld [vmem:[%s2] sm:$0xf]
    %v23 = vld [vmem:[%s2 + $0x4] sm:$0xf]
    %v24 = vld [vmem:[%s0] sm:$0xf]
    %v25 = vld [vmem:[%s0 + $0x4] sm:$0xf]
    %v26 = vld [vmem:[%s0 + $0x8] sm:$0xf]
    %v27 = vld [vmem:[%s0 + $0xc] sm:$0xf]
    %v28 = vld [vmem:[%s0 + $0x10] sm:$0xf]
    %v29 = vld [vmem:[%s0 + $0x14] sm:$0xf]
    %v30 = vld [vmem:[%s0 + $0x18] sm:$0xf]
    %v31 = vld [vmem:[%s0 + $0x1c] sm:$0xf]
    %v32 = vld [vmem:[%s0 + $0x20] sm:$0xf]
    %v33 = vld [vmem:[%s0 + $0x24] sm:$0xf]
    %v34 = vld [vmem:[%s0 + $0x28] sm:$0xf]
    %v35 = vld [vmem:[%s0 + $0x2c] sm:$0xf]
    %v36 = vld [vmem:[%s0 + $0x30] sm:$0xf]
    %v37 = vld [vmem:[%s0 + $0x34] sm:$0xf]
    %v38 = vld [vmem:[%s0 + $0x38] sm:$0xf]
    %v39 = vld [vmem:[%s0 + $0x3c] sm:$0xf]
    %v42 = vunpack.c.l.b16 %v22
    %v43 = vunpack.c.l.b16 %v23
    %v44 = vpack.c.b16 %v43, %v42
    %v62 = vunpack.c.l.b16 %v24
    %v63 = vunpack.c.l.b16 %v25
    %v64 = vunpack.c.l.b16 %v26
    %v65 = vunpack.c.l.b16 %v27
    %v66 = vunpack.c.l.b16 %v28
    %v67 = vunpack.c.l.b16 %v29
    %v68 = vunpack.c.l.b16 %v30
    %v69 = vunpack.c.l.b16 %v31
    %v70 = vunpack.c.l.b16 %v32
    %v71 = vunpack.c.l.b16 %v33
    %v72 = vunpack.c.l.b16 %v34
    %v73 = vunpack.c.l.b16 %v35
    %v74 = vunpack.c.l.b16 %v36
    %v75 = vunpack.c.l.b16 %v37
    %v76 = vunpack.c.l.b16 %v38
    %v77 = vunpack.c.l.b16 %v39
    %v78 = vpack.c.b16 %v63, %v62
    %v79 = vpack.c.b16 %v65, %v64
    %v80 = vpack.c.b16 %v67, %v66
    %v81 = vpack.c.b16 %v69, %v68
    %v82 = vpack.c.b16 %v71, %v70
    %v83 = vpack.c.b16 %v73, %v72
    %v84 = vpack.c.b16 %v75, %v74
    %v85 = vpack.c.b16 %v77, %v76
    %94 = vmatprep.subr.bf16.mxu0 0
    %95 = vmatpush1.bf16.msra.mxu0 %v78
    %96 = vmatprep.subr.bf16.mxu0 0
    %97 = vmatpush1.bf16.msra.mxu0 %v79
    %98 = vmatprep.subr.bf16.mxu0 0
    %99 = vmatpush1.bf16.msra.mxu0 %v80
    %100 = vmatprep.subr.bf16.mxu0 0
    %101 = vmatpush1.bf16.msra.mxu0 %v81
    %102 = vmatprep.subr.bf16.mxu0 0
    %103 = vmatpush1.bf16.msra.mxu0 %v82
    %104 = vmatprep.subr.bf16.mxu0 0
    %105 = vmatpush1.bf16.msra.mxu0 %v83
    %106 = vmatprep.subr.bf16.mxu0 0
    %107 = vmatpush1.bf16.msra.mxu0 %v84
    %108 = vmatprep.subr.bf16.mxu0 0
    %109 = vmatpush1.bf16.msra.mxu0 %v85
    %110 = vmatprep.subr.bf16.mxu0 0
    %111 = vmatpush1.bf16.msra.mxu0 0
    %112 = vmatprep.subr.bf16.mxu0 0
    %113 = vmatpush1.bf16.msra.mxu0 0
    %114 = vmatprep.subr.bf16.mxu0 0
    %115 = vmatpush1.bf16.msra.mxu0 0
    %116 = vmatprep.subr.bf16.mxu0 0
    %117 = vmatpush1.bf16.msra.mxu0 0
    %118 = vmatprep.subr.bf16.mxu0 0
    %119 = vmatpush1.bf16.msra.mxu0 0
    %120 = vmatprep.subr.bf16.mxu0 0
    %121 = vmatpush1.bf16.msra.mxu0 0
    %122 = vmatprep.subr.bf16.mxu0 0
    %123 = vmatpush1.bf16.msra.mxu0 0
    %124 = vmatprep.subr.bf16.mxu0 0
    %125 = vmatpush1.bf16.msra.mxu0 0
    %126 = vmatprep.mubr.bf16.mxu0 0
    %127 = vmatmul.mubr.bf16.gmra.mrb[0].mxu0 %v44
    %v128 = vpop.f32.mrb[0].mxu0
    %v129 = vadd.f32 0.0, %v128
    %v130 = vpop.f32.mrb[0].mxu0
    %v131 = vpop.f32.mrb[0].mxu0
    %v132 = vadd.f32 0.0, %v131
    %v133 = vpop.f32.mrb[0].mxu0
    %134 = vdwg.mxu0
    %p135 = scmp.eq.s32.totalorder 0, 0
    // Predicated region
    $region22: #{_gcnii_forward_impl.1} parent=1 // pred_check
      %p136 = pneg %p135
    $region23: #{_gcnii_forward_impl.1} parent=1 // pred_check_branch
      %138 = sbr.rel (%p136) target = $region25
    $region24: #{_gcnii_forward_impl.1} parent=1 // pred_region
      %139 = vst [vmem:[#allocation2] sm:$0xff] %v129
      %140 = vst [vmem:[#allocation2 + $0x8] sm:$0xff] %v132
    $region25: #{_gcnii_forward_impl.1} parent=1 // pred_fallthru
      _
    %p141 = scmp.gt.s32.totalorder 0, 0
    // Predicated region
    $region26: #{_gcnii_forward_impl.1} parent=1 // pred_check
      %p142 = pneg %p141
    $region27: #{_gcnii_forward_impl.1} parent=1 // pred_check_branch
      %144 = sbr.rel (%p142) target = $region29
    $region28: #{_gcnii_forward_impl.1} parent=1 // pred_region
      %v145 = vld [vmem:[#allocation2] sm:$0xff]
      %v146 = vld [vmem:[#allocation2 + $0x8] sm:$0xff]
      %v147 = vadd.f32 %v145, %v129
      %v148 = vadd.f32 %v146, %v132
      %149 = vst [vmem:[#allocation2] sm:$0xff] %v147
      %150 = vst [vmem:[#allocation2 + $0x8] sm:$0xff] %v148
    $region29: #{_gcnii_forward_impl.1} parent=1 // pred_fallthru
      _
    // Predicated region
    $region30: #{_gcnii_forward_impl.1} parent=1 // pred_check
      %p151 = pneg %p135
    $region31: #{_gcnii_forward_impl.1} parent=1 // pred_check_branch
      %153 = sbr.rel (%p151) target = $region33
    $region32: #{_gcnii_forward_impl.1} parent=1 // pred_region
      %v154 = vld [vmem:[#allocation2] sm:$0xff]
      %v155 = vld [vmem:[#allocation2 + $0x8] sm:$0xff]
      %v156 = vmul.f32 %v154, 0.8
      %v157 = vmul.f32 %v155, 0.8
      %v158 = vld [vmem:[%s1] sm:$0xf]
      %v159 = vld [vmem:[%s1 + $0x4] sm:$0xf]
      %v160 = vunpack.c.l.bf16 %v158
      %v161 = vunpack.c.l.bf16 %v159
      %v162 = vmul.f32 %v160, 0.2
      %v163 = vmul.f32 %v161, 0.2
      %v164 = vadd.f32 %v156, %v162
      %v165 = vadd.f32 %v157, %v163
      %v166 = vpack.c.bf16 %v165, %v164
      %v167 = vld [vmem:[%s3] sm:$0xf]
      %v168 = vld [vmem:[%s3 + $0x4] sm:$0xf]
      %v169 = vld [vmem:[%s3 + $0x8] sm:$0xf]
      %v170 = vld [vmem:[%s3 + $0xc] sm:$0xf]
      %v171 = vld [vmem:[%s3 + $0x10] sm:$0xf]
      %v172 = vld [vmem:[%s3 + $0x14] sm:$0xf]
      %v173 = vld [vmem:[%s3 + $0x18] sm:$0xf]
      %v174 = vld [vmem:[%s3 + $0x1c] sm:$0xf]
      %v175 = vld [vmem:[%s3 + $0x20] sm:$0xf]
      %v176 = vld [vmem:[%s3 + $0x24] sm:$0xf]
      %v177 = vld [vmem:[%s3 + $0x28] sm:$0xf]
      %v178 = vld [vmem:[%s3 + $0x2c] sm:$0xf]
      %v179 = vld [vmem:[%s3 + $0x30] sm:$0xf]
      %v180 = vld [vmem:[%s3 + $0x34] sm:$0xf]
      %v181 = vld [vmem:[%s3 + $0x38] sm:$0xf]
      %v182 = vld [vmem:[%s3 + $0x3c] sm:$0xf]
      %v183 = vld [vmem:[%s4] sm:$0xff]
      %v184 = vld [vmem:[%s4 + $0x8] sm:$0xff]
      %v201 = vunpack.c.l.b16 %v167
      %v202 = vunpack.c.l.b16 %v168
      %v203 = vunpack.c.l.b16 %v169
      %v204 = vunpack.c.l.b16 %v170
      %v205 = vunpack.c.l.b16 %v171
      %v206 = vunpack.c.l.b16 %v172
      %v207 = vunpack.c.l.b16 %v173
      %v208 = vunpack.c.l.b16 %v174
      %v209 = vunpack.c.l.b16 %v175
      %v210 = vunpack.c.l.b16 %v176
      %v211 = vunpack.c.l.b16 %v177
      %v212 = vunpack.c.l.b16 %v178
      %v213 = vunpack.c.l.b16 %v179
      %v214 = vunpack.c.l.b16 %v180
      %v215 = vunpack.c.l.b16 %v181
      %v216 = vunpack.c.l.b16 %v182
      %v217 = vpack.c.b16 %v202, %v201
      %v218 = vpack.c.b16 %v204, %v203
      %v219 = vpack.c.b16 %v206, %v205
      %v220 = vpack.c.b16 %v208, %v207
      %v221 = vpack.c.b16 %v210, %v209
      %v222 = vpack.c.b16 %v212, %v211
      %v223 = vpack.c.b16 %v214, %v213
      %v224 = vpack.c.b16 %v216, %v215
      %233 = vmatprep.subr.bf16.mxu0 0
      %234 = vmatpush1.bf16.msra.mxu0 %v217
      %235 = vmatprep.subr.bf16.mxu0 0
      %236 = vmatpush1.bf16.msra.mxu0 %v218
      %237 = vmatprep.subr.bf16.mxu0 0
      %238 = vmatpush1.bf16.msra.mxu0 %v219
      %239 = vmatprep.subr.bf16.mxu0 0
      %240 = vmatpush1.bf16.msra.mxu0 %v220
      %241 = vmatprep.subr.bf16.mxu0 0
      %242 = vmatpush1.bf16.msra.mxu0 %v221
      %243 = vmatprep.subr.bf16.mxu0 0
      %244 = vmatpush1.bf16.msra.mxu0 %v222
      %245 = vmatprep.subr.bf16.mxu0 0
      %246 = vmatpush1.bf16.msra.mxu0 %v223
      %247 = vmatprep.subr.bf16.mxu0 0
      %248 = vmatpush1.bf16.msra.mxu0 %v224
      %249 = vmatprep.subr.bf16.mxu0 0
      %250 = vmatpush1.bf16.msra.mxu0 0
      %251 = vmatprep.subr.bf16.mxu0 0
      %252 = vmatpush1.bf16.msra.mxu0 0
      %253 = vmatprep.subr.bf16.mxu0 0
      %254 = vmatpush1.bf16.msra.mxu0 0
      %255 = vmatprep.subr.bf16.mxu0 0
      %256 = vmatpush1.bf16.msra.mxu0 0
      %257 = vmatprep.subr.bf16.mxu0 0
      %258 = vmatpush1.bf16.msra.mxu0 0
      %259 = vmatprep.subr.bf16.mxu0 0
      %260 = vmatpush1.bf16.msra.mxu0 0
      %261 = vmatprep.subr.bf16.mxu0 0
      %262 = vmatpush1.bf16.msra.mxu0 0
      %263 = vmatprep.subr.bf16.mxu0 0
      %264 = vmatpush1.bf16.msra.mxu0 0
      %265 = vmatprep.mubr.bf16.mxu0 0
      %266 = vmatmul.mubr.bf16.gmra.mrb[0].mxu0 %v166
      %v267 = vpop.f32.mrb[0].mxu0
      %v268 = vadd.f32 %v183, %v267
      %v269 = vpop.f32.mrb[0].mxu0
      %v270 = vpop.f32.mrb[0].mxu0
      %v271 = vadd.f32 %v184, %v270
      %v272 = vpop.f32.mrb[0].mxu0
      %273 = vdwg.mxu0
      %274 = vst [vmem:[#allocation3] sm:$0xff] %v268
      %275 = vst [vmem:[#allocation3 + $0x8] sm:$0xff] %v271
    $region33: #{_gcnii_forward_impl.1} parent=1 // pred_fallthru
      _
    // Predicated region
    $region34: #{_gcnii_forward_impl.1} parent=1 // pred_check
      _
    $region35: #{_gcnii_forward_impl.1} parent=1 // pred_check_branch
      %277 = sbr.rel (0) target = $region37
    $region36: #{_gcnii_forward_impl.1} parent=1 // pred_region
      %s279 = ssub.s32 256, 256
      %280 = vsyncadd [#allocation4], %s279
      %s281 = sshll.u32 [#allocation3], 4
      %s282 = int_to_ptr.vmem [resolvable:$true] %s281
      %287 = dma.vmem_to_hbm [thread:$0]  %s282, 256, %s5, [#allocation4], 128, 128, 8
    $region37: #{_gcnii_forward_impl.1} parent=1 // pred_fallthru
      _
    // Predicated region
    $region38: #{_gcnii_forward_impl.1} parent=1 // pred_check
      _
    $region39: #{_gcnii_forward_impl.1} parent=1 // pred_check_branch
      %289 = sbr.rel (0) target = $region41
    $region40: #{_gcnii_forward_impl.1} parent=1 // pred_region
      %290 = dma.done [#allocation4], 256
    $region41: #{_gcnii_forward_impl.1} parent=1 // pred_fallthru
      _
    %291 = vsyncpa [#allocation4], 1

</llo_original>
